<compile_context>
chip_gen: v7x
topology: tpu7x:2x2x1
jax: 0.10.0
libtpu: 0.0.40
codegen_flags: <defaults>
</compile_context>

<pallas_src>
import jax
import jax.numpy as jnp
from jax.experimental import pallas as pl
from jax.experimental.pallas import tpu as pltpu


def norm_encoder_kernel(x_ref, w1_ref, b1_ref, w21_ref, b21_ref,
                        w22_ref, b22_ref, loc_ref, scale_ref):
    # fc1: [tb, item] @ [item, hidden], bf16 MXU inputs, f32 accumulation.
    h = jnp.dot(x_ref[...], w1_ref[...], preferred_element_type=jnp.float32)
    h = h + b1_ref[...]
    # Softplus, numerically stable, in f32 on the VPU/EUP:
    #   softplus(h) = max(h, 0) + log(1 + exp(-|h|))
    h = jnp.maximum(h, 0.0) + jnp.log(1.0 + jnp.exp(-jnp.abs(h)))
    # Second-layer MXU inputs back to bf16; accumulate in f32.
    h_in = h.astype(w21_ref.dtype)
    loc = jnp.dot(h_in, w21_ref[...], preferred_element_type=jnp.float32)
    loc = loc + b21_ref[...]
    log_s = jnp.dot(h_in, w22_ref[...], preferred_element_type=jnp.float32)
    log_s = log_s + b22_ref[...]
    loc_ref[...] = loc.astype(loc_ref.dtype)
    scale_ref[...] = jnp.exp(log_s).astype(scale_ref.dtype)   # exp -> EUP slot


def norm_encoder(x, w1, b1, w21, b21, w22, b22, *, tb=2048,
                 compute_dtype=jnp.bfloat16, out_dtype=jnp.float32):
    """x: [B, item_size]; w1: [item_size, hidden]; b1: [1, hidden];
    w21, w22: [hidden, x_dim]; b21, b22: [1, x_dim]
    -> (loc: [B, x_dim], scale: [B, x_dim])."""
    B, item_size = x.shape
    hidden_dim = w1.shape[1]
    x_dim = w21.shape[1]
    assert w22.shape == (hidden_dim, x_dim)

    # ---- batch-tile selection ------------------------------------------
    # Big tiles amortize the fixed per-grid-step cost; keep >=2 grid steps
    # when the batch allows so the "parallel" axis can be split across the
    # two TensorCores on v7x. Sublane multiple: 16 for bf16 activations.
    sub = 16 if compute_dtype == jnp.bfloat16 else 8
    tb_eff = min(tb, B)
    if B > sub and pl.cdiv(B, tb_eff) < 2:
        tb_eff = pl.cdiv(B, 2)
    tb_eff = max(sub, ((tb_eff + sub - 1) // sub) * sub)
    grid_b = pl.cdiv(B, tb_eff)
    b_pad = grid_b * tb_eff

    # Narrow MXU inputs (bandwidth win); biases stay f32 for the VPU adds.
    xc = x.astype(compute_dtype)
    w1c = w1.astype(compute_dtype)
    w21c = w21.astype(compute_dtype)
    w22c = w22.astype(compute_dtype)
    b1c = b1.astype(jnp.float32)
    b21c = b21.astype(jnp.float32)
    b22c = b22.astype(jnp.float32)

    if b_pad != B:
        xc = jnp.pad(xc, ((0, b_pad - B), (0, 0)))

    tiled = lambda i: (i, 0)       # batch-tiled arrays
    resident = lambda i: (0, 0)    # grid-invariant weights/biases

    loc, scale = pl.pallas_call(
        norm_encoder_kernel,
        out_shape=(jax.ShapeDtypeStruct((b_pad, x_dim), out_dtype),
                   jax.ShapeDtypeStruct((b_pad, x_dim), out_dtype)),
        grid_spec=pltpu.PrefetchScalarGridSpec(
            num_scalar_prefetch=0,
            grid=(grid_b,),
            in_specs=[
                pl.BlockSpec((tb_eff, item_size), tiled),          # x tile
                pl.BlockSpec((item_size, hidden_dim), resident),   # w1
                pl.BlockSpec((1, hidden_dim), resident),           # b1
                pl.BlockSpec((hidden_dim, x_dim), resident),       # w21
                pl.BlockSpec((1, x_dim), resident),                # b21
                pl.BlockSpec((hidden_dim, x_dim), resident),       # w22
                pl.BlockSpec((1, x_dim), resident),                # b22
            ],
            out_specs=[pl.BlockSpec((tb_eff, x_dim), tiled),
                       pl.BlockSpec((tb_eff, x_dim), tiled)],
        ),
        compiler_params=pltpu.CompilerParams(
            dimension_semantics=("parallel",),
            # VMEM budget is tiny here (<~3 MiB even at tb=4096), so no
            # vmem_limit_bytes override is needed on v7x's 64 MiB VMEM.
        ),
    )(xc, w1c, b1c, w21c, b21c, w22c, b22c)

    if b_pad != B:
        loc, scale = loc[:B], scale[:B]
    return loc, scale


def norm_encoder_ref(x, w1, b1, w21, b21, w22, b22,
                     compute_dtype=jnp.bfloat16):
    """Plain-JAX reference with identical dtype plumbing to the kernel."""
    xc = x.astype(compute_dtype)
    h = jnp.dot(xc, w1.astype(compute_dtype),
                preferred_element_type=jnp.float32) + b1
    h = jnp.maximum(h, 0.0) + jnp.log(1.0 + jnp.exp(-jnp.abs(h)))
    hc = h.astype(compute_dtype)
    loc = jnp.dot(hc, w21.astype(compute_dtype),
                  preferred_element_type=jnp.float32) + b21
    log_s = jnp.dot(hc, w22.astype(compute_dtype),
                    preferred_element_type=jnp.float32) + b22
    return loc, jnp.exp(log_s)


def init_params(key, item_size, hidden_dim, x_dim):
    """Deterministic init mimicking nn.Linear defaults (uniform +/- 1/sqrt(fan_in)).
    Weights are stored transposed ([in, out]) relative to PyTorch's [out, in]."""
    k = jax.random.split(key, 6)
    lim1 = 1.0 / jnp.sqrt(jnp.float32(item_size))
    lim2 = 1.0 / jnp.sqrt(jnp.float32(hidden_dim))
    w1 = jax.random.uniform(k[0], (item_size, hidden_dim), jnp.float32, -lim1, lim1)
    b1 = jax.random.uniform(k[1], (1, hidden_dim), jnp.float32, -lim1, lim1)
    w21 = jax.random.uniform(k[2], (hidden_dim, x_dim), jnp.float32, -lim2, lim2)
    b21 = jax.random.uniform(k[3], (1, x_dim), jnp.float32, -lim2, lim2)
    w22 = jax.random.uniform(k[4], (hidden_dim, x_dim), jnp.float32, -lim2, lim2)
    b22 = jax.random.uniform(k[5], (1, x_dim), jnp.float32, -lim2, lim2)
    return w1, b1, w21, b21, w22, b22


if __name__ == "__main__":
    item_size, x_dim, hidden_dim = 32, 16, 64
    batch = 256   # small test batch; tile logic keeps a 2-step parallel grid

    key = jax.random.PRNGKey(0)
    kx, kp = jax.random.split(key)
    x = jax.random.normal(kx, (batch, item_size), jnp.float32)
    params = init_params(kp, item_size, hidden_dim, x_dim)

    loc, scale = norm_encoder(x, *params)
    loc, scale = jax.block_until_ready((loc, scale))

    ref_loc, ref_scale = norm_encoder_ref(x, *params)
    assert loc.shape == (batch, x_dim) and scale.shape == (batch, x_dim)
    assert jnp.allclose(loc, ref_loc, atol=5e-3, rtol=5e-3)
    assert jnp.allclose(scale, ref_scale, atol=5e-3, rtol=5e-3)
    assert bool(jnp.all(scale > 0.0))

    print("KERNEL_OK")
</pallas_src>

<mosaic_0001>
module attributes {stable_mosaic.version = 11 : i64} {
  func.func @norm_encoder_kernel(%arg0: i32, %arg1: memref<128x32xbf16, #tpu.memory_space<vmem>>, %arg2: memref<32x64xbf16, #tpu.memory_space<vmem>>, %arg3: memref<1x64xf32, #tpu.memory_space<vmem>>, %arg4: memref<64x16xbf16, #tpu.memory_space<vmem>>, %arg5: memref<1x16xf32, #tpu.memory_space<vmem>>, %arg6: memref<64x16xbf16, #tpu.memory_space<vmem>>, %arg7: memref<1x16xf32, #tpu.memory_space<vmem>>, %arg8: memref<128x16xf32, #tpu.memory_space<vmem>>, %arg9: memref<128x16xf32, #tpu.memory_space<vmem>>) attributes {dimension_semantics = [#tpu.dimension_semantics<parallel>], iteration_bounds = array<i64: 2>, scalar_prefetch = 0 : i64, scratch_operands = 0 : i64, tpu.core_type = #tpu.core_type<tc>, window_params = [{transform_indices = @transform_0, window_bounds = array<i64: 128, 32>}, {pipeline_mode = #tpu.pipeline_mode<synchronous>, transform_indices = @transform_1, window_bounds = array<i64: 32, 64>}, {pipeline_mode = #tpu.pipeline_mode<synchronous>, transform_indices = @transform_2, window_bounds = array<i64: 1, 64>}, {pipeline_mode = #tpu.pipeline_mode<synchronous>, transform_indices = @transform_3, window_bounds = array<i64: 64, 16>}, {pipeline_mode = #tpu.pipeline_mode<synchronous>, transform_indices = @transform_4, window_bounds = array<i64: 1, 16>}, {pipeline_mode = #tpu.pipeline_mode<synchronous>, transform_indices = @transform_5, window_bounds = array<i64: 64, 16>}, {pipeline_mode = #tpu.pipeline_mode<synchronous>, transform_indices = @transform_6, window_bounds = array<i64: 1, 16>}, {transform_indices = @transform_7, window_bounds = array<i64: 128, 16>}, {transform_indices = @transform_8, window_bounds = array<i64: 128, 16>}]} {
    %c0 = arith.constant 0 : index
    %c0_0 = arith.constant 0 : index
    %0 = vector.load %arg1[%c0, %c0_0] : memref<128x32xbf16, #tpu.memory_space<vmem>>, vector<128x32xbf16>
    %c0_1 = arith.constant 0 : index
    %c0_2 = arith.constant 0 : index
    %1 = vector.load %arg2[%c0_1, %c0_2] : memref<32x64xbf16, #tpu.memory_space<vmem>>, vector<32x64xbf16>
    %cst = arith.constant dense<0.000000e+00> : vector<128x64xf32>
    %2 = tpu.matmul %0, %1, %cst {dimension_numbers = #tpu.dot_dimension_numbers<[1], [0], [0], [1], [0, 0, 1, 1], [], []>} : vector<128x32xbf16>, vector<32x64xbf16>, vector<128x64xf32> -> vector<128x64xf32>
    %c0_3 = arith.constant 0 : index
    %c0_4 = arith.constant 0 : index
    %3 = vector.load %arg3[%c0_3, %c0_4] : memref<1x64xf32, #tpu.memory_space<vmem>>, vector<1x64xf32>
    %4 = vector.broadcast %3 : vector<1x64xf32> to vector<128x64xf32>
    %5 = arith.addf %2, %4 : vector<128x64xf32>
    %cst_5 = arith.constant 0.000000e+00 : f32
    %6 = vector.broadcast %cst_5 : f32 to vector<128x64xf32>
    %7 = arith.maximumf %5, %6 : vector<128x64xf32>
    %8 = math.absf %5 : vector<128x64xf32>
    %cst_6 = arith.constant 0.000000e+00 : f32
    %9 = vector.broadcast %cst_6 : f32 to vector<128x64xf32>
    %10 = arith.subf %9, %8 : vector<128x64xf32>
    %11 = math.exp %10 : vector<128x64xf32>
    %cst_7 = arith.constant 1.000000e+00 : f32
    %12 = vector.broadcast %cst_7 : f32 to vector<128x64xf32>
    %13 = arith.addf %12, %11 : vector<128x64xf32>
    %14 = math.log %13 : vector<128x64xf32>
    %15 = arith.addf %7, %14 : vector<128x64xf32>
    %16 = arith.truncf %15 : vector<128x64xf32> to vector<128x64xbf16>
    %c0_8 = arith.constant 0 : index
    %c0_9 = arith.constant 0 : index
    %17 = vector.load %arg4[%c0_8, %c0_9] : memref<64x16xbf16, #tpu.memory_space<vmem>>, vector<64x16xbf16>
    %cst_10 = arith.constant dense<0.000000e+00> : vector<128x16xf32>
    %18 = tpu.matmul %16, %17, %cst_10 {dimension_numbers = #tpu.dot_dimension_numbers<[1], [0], [0], [1], [0, 0, 1, 1], [], []>} : vector<128x64xbf16>, vector<64x16xbf16>, vector<128x16xf32> -> vector<128x16xf32>
    %c0_11 = arith.constant 0 : index
    %c0_12 = arith.constant 0 : index
    %19 = vector.load %arg5[%c0_11, %c0_12] : memref<1x16xf32, #tpu.memory_space<vmem>>, vector<1x16xf32>
    %20 = vector.broadcast %19 : vector<1x16xf32> to vector<128x16xf32>
    %21 = arith.addf %18, %20 : vector<128x16xf32>
    %c0_13 = arith.constant 0 : index
    %c0_14 = arith.constant 0 : index
    %22 = vector.load %arg6[%c0_13, %c0_14] : memref<64x16xbf16, #tpu.memory_space<vmem>>, vector<64x16xbf16>
    %cst_15 = arith.constant dense<0.000000e+00> : vector<128x16xf32>
    %23 = tpu.matmul %16, %22, %cst_15 {dimension_numbers = #tpu.dot_dimension_numbers<[1], [0], [0], [1], [0, 0, 1, 1], [], []>} : vector<128x64xbf16>, vector<64x16xbf16>, vector<128x16xf32> -> vector<128x16xf32>
    %c0_16 = arith.constant 0 : index
    %c0_17 = arith.constant 0 : index
    %24 = vector.load %arg7[%c0_16, %c0_17] : memref<1x16xf32, #tpu.memory_space<vmem>>, vector<1x16xf32>
    %25 = vector.broadcast %24 : vector<1x16xf32> to vector<128x16xf32>
    %26 = arith.addf %23, %25 : vector<128x16xf32>
    %c0_18 = arith.constant 0 : index
    %c0_19 = arith.constant 0 : index
    %27 = vector.load %arg8[%c0_18, %c0_19] : memref<128x16xf32, #tpu.memory_space<vmem>>, vector<128x16xf32>
    tpu.vector_store %arg8[%c0_18, %c0_19], %21 {strides = array<i32>} : memref<128x16xf32, #tpu.memory_space<vmem>>, vector<128x16xf32>,
    %28 = math.exp %26 : vector<128x16xf32>
    %c0_20 = arith.constant 0 : index
    %c0_21 = arith.constant 0 : index
    %29 = vector.load %arg9[%c0_20, %c0_21] : memref<128x16xf32, #tpu.memory_space<vmem>>, vector<128x16xf32>
    tpu.vector_store %arg9[%c0_20, %c0_21], %28 {strides = array<i32>} : memref<128x16xf32, #tpu.memory_space<vmem>>, vector<128x16xf32>,
    return
  }
  func.func @transform_0(%arg0: i32) -> (i32, i32) {
    %c0_i32 = arith.constant 0 : i32
    %c0_i32_0 = arith.constant 0 : i32
    return %arg0, %c0_i32 : i32, i32
  }
  func.func @transform_1(%arg0: i32) -> (i32, i32) {
    %c0_i32 = arith.constant 0 : i32
    %c0_i32_0 = arith.constant 0 : i32
    %c0_i32_1 = arith.constant 0 : i32
    return %c0_i32, %c0_i32_0 : i32, i32
  }
  func.func @transform_2(%arg0: i32) -> (i32, i32) {
    %c0_i32 = arith.constant 0 : i32
    %c0_i32_0 = arith.constant 0 : i32
    %c0_i32_1 = arith.constant 0 : i32
    return %c0_i32, %c0_i32_0 : i32, i32
  }
  func.func @transform_3(%arg0: i32) -> (i32, i32) {
    %c0_i32 = arith.constant 0 : i32
    %c0_i32_0 = arith.constant 0 : i32
    %c0_i32_1 = arith.constant 0 : i32
    return %c0_i32, %c0_i32_0 : i32, i32
  }
  func.func @transform_4(%arg0: i32) -> (i32, i32) {
    %c0_i32 = arith.constant 0 : i32
    %c0_i32_0 = arith.constant 0 : i32
    %c0_i32_1 = arith.constant 0 : i32
    return %c0_i32, %c0_i32_0 : i32, i32
  }
  func.func @transform_5(%arg0: i32) -> (i32, i32) {
    %c0_i32 = arith.constant 0 : i32
    %c0_i32_0 = arith.constant 0 : i32
    %c0_i32_1 = arith.constant 0 : i32
    return %c0_i32, %c0_i32_0 : i32, i32
  }
  func.func @transform_6(%arg0: i32) -> (i32, i32) {
    %c0_i32 = arith.constant 0 : i32
    %c0_i32_0 = arith.constant 0 : i32
    %c0_i32_1 = arith.constant 0 : i32
    return %c0_i32, %c0_i32_0 : i32, i32
  }
  func.func @transform_7(%arg0: i32) -> (i32, i32) {
    %c0_i32 = arith.constant 0 : i32
    %c0_i32_0 = arith.constant 0 : i32
    return %arg0, %c0_i32 : i32, i32
  }
  func.func @transform_8(%arg0: i32) -> (i32, i32) {
    %c0_i32 = arith.constant 0 : i32
    %c0_i32_0 = arith.constant 0 : i32
    return %arg0, %c0_i32 : i32, i32
  }
}

</mosaic_0001>

<llo_original>
// kernel: tpu_custom_call.1
$region0: #{tpu_custom_call.1}
  #allocation0 [shape = 'u32[]', space=smem, size = 0x4, offset = 0x4, fixed_abs, tag = 'smem constant byte address 0x4 - core index']
  #allocation1 [shape = 'u32[144,128]{1,0:T(1,128)}', space=vmem, size = 0x12000, scoped, tag = 'internal scratch']
  %s0 = inlined_call_operand.vmem [shape: bf16[256,32], index: 0, kind: input, shape index: {}]
  %s1 = inlined_call_operand.vmem [shape: bf16[32,64], index: 1, kind: input, shape index: {}]
  %s2 = inlined_call_operand.vmem [shape: f32[1,64], index: 2, kind: input, shape index: {}]
  %s3 = inlined_call_operand.vmem [shape: bf16[64,16], index: 3, kind: input, shape index: {}]
  %s4 = inlined_call_operand.vmem [shape: f32[1,16], index: 4, kind: input, shape index: {}]
  %s5 = inlined_call_operand.vmem [shape: bf16[64,16], index: 5, kind: input, shape index: {}]
  %s6 = inlined_call_operand.vmem [shape: f32[1,16], index: 6, kind: input, shape index: {}]
  %s7 = inlined_call_operand.vmem [shape: f32[256,16], index: 7, kind: output, shape index: {0}]
  %s8 = inlined_call_operand.vmem [shape: f32[256,16], index: 8, kind: output, shape index: {1}]
  %9 = xla_tuple %s7, %s8
  %s10 = sld [smem:[#allocation0]]
  $region69: #{tpu_custom_call.1} parent=0
    _
  %s12 = ssub.s32 1, %s10
  %s13 = scalar_select 0, %s12, %s10
  loop: start=0, step=1, limit=4
  $region2: #{tpu_custom_call.1} parent=0 // loop_pre_header
    _
  $region3: #{tpu_custom_call.1} parent=0 // loop_header
    %s15 = sphi 0, %s19
    %p16 = scmp.ge.s32.totalorder %s15, 4
    %s25 = sphi 0, %s27
    %s28 = sphi 0, %s25
    %s29 = sphi 0, %s28
    %s45 = sphi 0, %s29
    %s49 = sphi 0, %s49
    %s51 = sphi 0, %s49
    %s52 = sphi 0, %s51
    %s66 = sphi 0, %s52
    %s70 = sphi 0, %s70
    %s72 = sphi 0, %s70
    %s73 = sphi 0, %s72
    %s87 = sphi 0, %s73
    %s91 = sphi 0, %s91
    %s93 = sphi 0, %s91
    %s94 = sphi 0, %s93
    %s108 = sphi 0, %s94
    %s112 = sphi 0, %s112
    %s114 = sphi 0, %s112
    %s115 = sphi 0, %s114
    %s129 = sphi 0, %s115
    %s133 = sphi 0, %s133
    %s135 = sphi 0, %s133
    %s136 = sphi 0, %s135
    %s150 = sphi 0, %s136
    %s154 = sphi 0, %s154
    %s156 = sphi 0, %s154
    %s157 = sphi 0, %s156
    %s171 = sphi 0, %s157
    %s177 = sphi 0, %s179
    %s180 = sphi 0, %s177
    %s181 = sphi 0, %s180
    %s197 = sphi 0, %s181
    %s203 = sphi 0, %s205
    %s206 = sphi 0, %s203
    %s207 = sphi 0, %s206
    %s223 = sphi 0, %s207
  $region4: #{tpu_custom_call.1} parent=0 // loop_header_branch
    %18 = sbr.rel (%p16) target = $region8
  $region5: #{tpu_custom_call.1} parent=0 // loop_body
    %s20 = ssub.s32 %s15, 1
    %s21 = ssub.s32 %s15, 2
    %s22 = sadd.s32 %s15, 1
    %s23 = ssub.s32 %s15, %s22
    %p24 = scmp.eq.s32.totalorder %s23, 0
    %s26 = sadd.s32 %s25, 1
    %s27 = scalar_select %p24, %s25, %s26
    %p30 = pneg %p24
    %p31 = scmp.eq.s32.totalorder %s15, 1
    %p32 = por %p30, %p31
    %p33 = scmp.ne.s32.totalorder %s25, %s28
    %p34 = scmp.eq.s32.totalorder %s15, 0
    %p35 = por %p33, %p34
    %p36 = scmp.ne.s32.totalorder %s25, %s28
    %p37 = scmp.eq.s32.totalorder %s20, 1
    %p38 = por %p36, %p37
    %p39 = scmp.ne.s32.totalorder %s28, %s29
    %p40 = scmp.eq.s32.totalorder %s20, 0
    %p41 = por %p39, %p40
    %p42 = scmp.ne.s32.totalorder %s28, %s29
    %p43 = scmp.eq.s32.totalorder %s21, 1
    %p44 = por %p42, %p43
    %p46 = scmp.ne.s32.totalorder %s29, %s45
    %p47 = scmp.eq.s32.totalorder %s21, 0
    %p48 = por %p46, %p47
    %s50 = sadd.s32 %s49, 1
    %p53 = scmp.eq.s32.totalorder %s15, 1
    %p54 = scmp.ne.s32.totalorder %s49, %s51
    %p55 = scmp.eq.s32.totalorder %s15, 0
    %p56 = por %p54, %p55
    %p57 = scmp.ne.s32.totalorder %s49, %s51
    %p58 = scmp.eq.s32.totalorder %s20, 1
    %p59 = por %p57, %p58
    %p60 = scmp.ne.s32.totalorder %s51, %s52
    %p61 = scmp.eq.s32.totalorder %s20, 0
    %p62 = por %p60, %p61
    %p63 = scmp.ne.s32.totalorder %s51, %s52
    %p64 = scmp.eq.s32.totalorder %s21, 1
    %p65 = por %p63, %p64
    %p67 = scmp.ne.s32.totalorder %s52, %s66
    %p68 = scmp.eq.s32.totalorder %s21, 0
    %p69 = por %p67, %p68
    %s71 = sadd.s32 %s70, 1
    %p74 = scmp.eq.s32.totalorder %s15, 1
    %p75 = scmp.ne.s32.totalorder %s70, %s72
    %p76 = scmp.eq.s32.totalorder %s15, 0
    %p77 = por %p75, %p76
    %p78 = scmp.ne.s32.totalorder %s70, %s72
    %p79 = scmp.eq.s32.totalorder %s20, 1
    %p80 = por %p78, %p79
    %p81 = scmp.ne.s32.totalorder %s72, %s73
    %p82 = scmp.eq.s32.totalorder %s20, 0
    %p83 = por %p81, %p82
    %p84 = scmp.ne.s32.totalorder %s72, %s73
    %p85 = scmp.eq.s32.totalorder %s21, 1
    %p86 = por %p84, %p85
    %p88 = scmp.ne.s32.totalorder %s73, %s87
    %p89 = scmp.eq.s32.totalorder %s21, 0
    %p90 = por %p88, %p89
    %s92 = sadd.s32 %s91, 1
    %p95 = scmp.eq.s32.totalorder %s15, 1
    %p96 = scmp.ne.s32.totalorder %s91, %s93
    %p97 = scmp.eq.s32.totalorder %s15, 0
    %p98 = por %p96, %p97
    %p99 = scmp.ne.s32.totalorder %s91, %s93
    %p100 = scmp.eq.s32.totalorder %s20, 1
    %p101 = por %p99, %p100
    %p102 = scmp.ne.s32.totalorder %s93, %s94
    %p103 = scmp.eq.s32.totalorder %s20, 0
    %p104 = por %p102, %p103
    %p105 = scmp.ne.s32.totalorder %s93, %s94
    %p106 = scmp.eq.s32.totalorder %s21, 1
    %p107 = por %p105, %p106
    %p109 = scmp.ne.s32.totalorder %s94, %s108
    %p110 = scmp.eq.s32.totalorder %s21, 0
    %p111 = por %p109, %p110
    %s113 = sadd.s32 %s112, 1
    %p116 = scmp.eq.s32.totalorder %s15, 1
    %p117 = scmp.ne.s32.totalorder %s112, %s114
    %p118 = scmp.eq.s32.totalorder %s15, 0
    %p119 = por %p117, %p118
    %p120 = scmp.ne.s32.totalorder %s112, %s114
    %p121 = scmp.eq.s32.totalorder %s20, 1
    %p122 = por %p120, %p121
    %p123 = scmp.ne.s32.totalorder %s114, %s115
    %p124 = scmp.eq.s32.totalorder %s20, 0
    %p125 = por %p123, %p124
    %p126 = scmp.ne.s32.totalorder %s114, %s115
    %p127 = scmp.eq.s32.totalorder %s21, 1
    %p128 = por %p126, %p127
    %p130 = scmp.ne.s32.totalorder %s115, %s129
    %p131 = scmp.eq.s32.totalorder %s21, 0
    %p132 = por %p130, %p131
    %s134 = sadd.s32 %s133, 1
    %p137 = scmp.eq.s32.totalorder %s15, 1
    %p138 = scmp.ne.s32.totalorder %s133, %s135
    %p139 = scmp.eq.s32.totalorder %s15, 0
    %p140 = por %p138, %p139
    %p141 = scmp.ne.s32.totalorder %s133, %s135
    %p142 = scmp.eq.s32.totalorder %s20, 1
    %p143 = por %p141, %p142
    %p144 = scmp.ne.s32.totalorder %s135, %s136
    %p145 = scmp.eq.s32.totalorder %s20, 0
    %p146 = por %p144, %p145
    %p147 = scmp.ne.s32.totalorder %s135, %s136
    %p148 = scmp.eq.s32.totalorder %s21, 1
    %p149 = por %p147, %p148
    %p151 = scmp.ne.s32.totalorder %s136, %s150
    %p152 = scmp.eq.s32.totalorder %s21, 0
    %p153 = por %p151, %p152
    %s155 = sadd.s32 %s154, 1
    %p158 = scmp.eq.s32.totalorder %s15, 1
    %p159 = scmp.ne.s32.totalorder %s154, %s156
    %p160 = scmp.eq.s32.totalorder %s15, 0
    %p161 = por %p159, %p160
    %p162 = scmp.ne.s32.totalorder %s154, %s156
    %p163 = scmp.eq.s32.totalorder %s20, 1
    %p164 = por %p162, %p163
    %p165 = scmp.ne.s32.totalorder %s156, %s157
    %p166 = scmp.eq.s32.totalorder %s20, 0
    %p167 = por %p165, %p166
    %p168 = scmp.ne.s32.totalorder %s156, %s157
    %p169 = scmp.eq.s32.totalorder %s21, 1
    %p170 = por %p168, %p169
    %p172 = scmp.ne.s32.totalorder %s157, %s171
    %p173 = scmp.eq.s32.totalorder %s21, 0
    %p174 = por %p172, %p173
    %s175 = ssub.s32 %s15, %s22
    %p176 = scmp.eq.s32.totalorder %s175, 0
    %s178 = sadd.s32 %s177, 1
    %s179 = scalar_select %p176, %s177, %s178
    %p182 = pneg %p176
    %p183 = scmp.eq.s32.totalorder %s15, 1
    %p184 = por %p182, %p183
    %p185 = scmp.ne.s32.totalorder %s177, %s180
    %p186 = scmp.eq.s32.totalorder %s15, 0
    %p187 = por %p185, %p186
    %p188 = scmp.ne.s32.totalorder %s177, %s180
    %p189 = scmp.eq.s32.totalorder %s20, 1
    %p190 = por %p188, %p189
    %p191 = scmp.ne.s32.totalorder %s180, %s181
    %p192 = scmp.eq.s32.totalorder %s20, 0
    %p193 = por %p191, %p192
    %p194 = scmp.ne.s32.totalorder %s180, %s181
    %p195 = scmp.eq.s32.totalorder %s21, 1
    %p196 = por %p194, %p195
    %p198 = scmp.ne.s32.totalorder %s181, %s197
    %p199 = scmp.eq.s32.totalorder %s21, 0
    %p200 = por %p198, %p199
    %s201 = ssub.s32 %s15, %s22
    %p202 = scmp.eq.s32.totalorder %s201, 0
    %s204 = sadd.s32 %s203, 1
    %s205 = scalar_select %p202, %s203, %s204
    %p208 = pneg %p202
    %p209 = scmp.eq.s32.totalorder %s15, 1
    %p210 = por %p208, %p209
    %p211 = scmp.ne.s32.totalorder %s203, %s206
    %p212 = scmp.eq.s32.totalorder %s15, 0
    %p213 = por %p211, %p212
    %p214 = scmp.ne.s32.totalorder %s203, %s206
    %p215 = scmp.eq.s32.totalorder %s20, 1
    %p216 = por %p214, %p215
    %p217 = scmp.ne.s32.totalorder %s206, %s207
    %p218 = scmp.eq.s32.totalorder %s20, 0
    %p219 = por %p217, %p218
    %p220 = scmp.ne.s32.totalorder %s206, %s207
    %p221 = scmp.eq.s32.totalorder %s21, 1
    %p222 = por %p220, %p221
    %p224 = scmp.ne.s32.totalorder %s207, %s223
    %p225 = scmp.eq.s32.totalorder %s21, 0
    %p226 = por %p224, %p225
    %p227 = scmp.le.s32.totalorder 1, %s15
    %p228 = scmp.lt.s32.totalorder %s15, 3
    %p229 = pnand %p227, %p228
    %p230 = pneg %p229
    // Predicated region
    $region9: #{tpu_custom_call.1} parent=5 // pred_check
      _
    $region10: #{tpu_custom_call.1} parent=5 // pred_check_branch
      %232 = sbr.rel (%p229) target = $region12
    $region11: #{tpu_custom_call.1} parent=5 // pred_region
      %s233 = ssub.s32 %s15, 1
      // Predicated region
      $region13: #{tpu_custom_call.1} parent=11 // pred_check
        %p234 = pneg %p62
      $region14: #{tpu_custom_call.1} parent=11 // pred_check_branch
        %236 = sbr.rel (%p234) target = $region16
      $region15: #{tpu_custom_call.1} parent=11 // pred_region
        _
      $region16: #{tpu_custom_call.1} parent=11 // pred_fallthru
        _
      // Predicated region
      $region17: #{tpu_custom_call.1} parent=11 // pred_check
        %p237 = pneg %p83
      $region18: #{tpu_custom_call.1} parent=11 // pred_check_branch
        %239 = sbr.rel (%p237) target = $region20
      $region19: #{tpu_custom_call.1} parent=11 // pred_region
        _
      $region20: #{tpu_custom_call.1} parent=11 // pred_fallthru
        _
      // Predicated region
      $region21: #{tpu_custom_call.1} parent=11 // pred_check
        %p240 = pneg %p104
      $region22: #{tpu_custom_call.1} parent=11 // pred_check_branch
        %242 = sbr.rel (%p240) target = $region24
      $region23: #{tpu_custom_call.1} parent=11 // pred_region
        _
      $region24: #{tpu_custom_call.1} parent=11 // pred_fallthru
        _
      // Predicated region
      $region25: #{tpu_custom_call.1} parent=11 // pred_check
        %p243 = pneg %p125
      $region26: #{tpu_custom_call.1} parent=11 // pred_check_branch
        %245 = sbr.rel (%p243) target = $region28
      $region27: #{tpu_custom_call.1} parent=11 // pred_region
        _
      $region28: #{tpu_custom_call.1} parent=11 // pred_fallthru
        _
      // Predicated region
      $region29: #{tpu_custom_call.1} parent=11 // pred_check
        %p246 = pneg %p146
      $region30: #{tpu_custom_call.1} parent=11 // pred_check_branch
        %248 = sbr.rel (%p246) target = $region32
      $region31: #{tpu_custom_call.1} parent=11 // pred_region
        _
      $region32: #{tpu_custom_call.1} parent=11 // pred_fallthru
        _
      // Predicated region
      $region33: #{tpu_custom_call.1} parent=11 // pred_check
        %p249 = pneg %p167
      $region34: #{tpu_custom_call.1} parent=11 // pred_check_branch
        %251 = sbr.rel (%p249) target = $region36
      $region35: #{tpu_custom_call.1} parent=11 // pred_region
        _
      $region36: #{tpu_custom_call.1} parent=11 // pred_fallthru
        _
    $region12: #{tpu_custom_call.1} parent=5 // pred_fallthru
      _
    %p252 = scmp.lt.s32.totalorder %s15, 2
    // Predicated region
    $region37: #{tpu_custom_call.1} parent=5 // pred_check
      %p253 = pneg %p252
    $region38: #{tpu_custom_call.1} parent=5 // pred_check_branch
      %255 = sbr.rel (%p253) target = $region40
    $region39: #{tpu_custom_call.1} parent=5 // pred_region
      // Predicated region
      $region41: #{tpu_custom_call.1} parent=39 // pred_check
        %p256 = pneg %p35
      $region42: #{tpu_custom_call.1} parent=39 // pred_check_branch
        %258 = sbr.rel (%p256) target = $region44
      $region43: #{tpu_custom_call.1} parent=39 // pred_region
        %s259 = smul.u32 16, %s15
        %p260 = scmp.lt.s32.totalorder %s259, 31
        %s261 = scalar_select %p260, %s259, 31
        %s262 = smul.addr %s261, 4
        %s263 = scalar_lea.vmem %s0, %s262
        %s264 = smul.u32 16, %s15
      $region44: #{tpu_custom_call.1} parent=39 // pred_fallthru
        _
    $region40: #{tpu_custom_call.1} parent=5 // pred_fallthru
      _
    %p265 = scmp.le.s32.totalorder 1, %s15
    %p266 = scmp.lt.s32.totalorder %s15, 3
    %p267 = pnand %p265, %p266
    %p268 = pneg %p267
    // Predicated region
    $region45: #{tpu_custom_call.1} parent=5 // pred_check
      _
    $region46: #{tpu_custom_call.1} parent=5 // pred_check_branch
      %270 = sbr.rel (%p267) target = $region48
    $region47: #{tpu_custom_call.1} parent=5 // pred_region
      %s271 = ssub.s32 %s15, 1
      %s272 = smul.u32 16, %s20
      %p273 = scmp.lt.s32.totalorder %s272, 31
      %s274 = scalar_select %p273, %s272, 31
      %s275 = smul.addr %s274, 4
      %s276 = scalar_lea.vmem %s0, %s275
      %p277 = pneg %p41
      %p278 = pneg %p38
      %p279 = pneg %p62
      %p280 = pneg %p59
      %p281 = pneg %p83
      %p282 = pneg %p80
      %p283 = pneg %p104
      %p284 = pneg %p101
      %p285 = pneg %p125
      %p286 = pneg %p122
      %p287 = pneg %p146
      %p288 = pneg %p143
      %p289 = pneg %p167
      %p290 = pneg %p164
      %p291 = pneg %p193
      %p292 = pneg %p190
      %s293 = smul.u32 16, %s20
      %p294 = scmp.lt.s32.totalorder %s293, 31
      %s295 = scalar_select %p294, %s293, 31
      %s296 = smul.addr %s295, 8
      %s297 = scalar_lea.vmem %s7, %s296
      %p298 = pneg %p219
      %p299 = pneg %p216
      %s300 = smul.u32 16, %s20
      %p301 = scmp.lt.s32.totalorder %s300, 31
      %s302 = scalar_select %p301, %s300, 31
      %s303 = smul.addr %s302, 8
      %s304 = scalar_lea.vmem %s8, %s303
      %s305 = smul.u32 16, %s20
      %p306 = scmp.lt.s32.totalorder %s305, 31
      %s307 = scalar_select %p306, %s305, 31
      %s308 = smul.addr %s307, 4
      %s309 = scalar_lea.vmem %s0, %s308
      %s310 = smul.u32 16, %s20
      %s311 = smul.u32 16, %s20
      %p312 = scmp.lt.s32.totalorder %s311, 31
      %s313 = scalar_select %p312, %s311, 31
      %s314 = smul.addr %s313, 8
      %s315 = scalar_lea.vmem %s7, %s314
      %s316 = smul.u32 16, %s20
      %s317 = smul.u32 16, %s20
      %p318 = scmp.lt.s32.totalorder %s317, 31
      %s319 = scalar_select %p318, %s317, 31
      %s320 = smul.addr %s319, 8
      %s321 = scalar_lea.vmem %s8, %s320
      %s322 = smul.u32 16, %s20
      %v324 = vld [vmem:[%s309] sm:$0xf]
      %v325 = vld [vmem:[%s309 + $0x4] sm:$0xf]
      %v326 = vld [vmem:[%s309 + $0x8] sm:$0xf]
      %v327 = vld [vmem:[%s309 + $0xc] sm:$0xf]
      %v328 = vld [vmem:[%s309 + $0x10] sm:$0xf]
      %v329 = vld [vmem:[%s309 + $0x14] sm:$0xf]
      %v330 = vld [vmem:[%s309 + $0x18] sm:$0xf]
      %v331 = vld [vmem:[%s309 + $0x1c] sm:$0xf]
      %v332 = vld [vmem:[%s309 + $0x20] sm:$0xf]
      %v333 = vld [vmem:[%s309 + $0x24] sm:$0xf]
      %v334 = vld [vmem:[%s309 + $0x28] sm:$0xf]
      %v335 = vld [vmem:[%s309 + $0x2c] sm:$0xf]
      %v336 = vld [vmem:[%s309 + $0x30] sm:$0xf]
      %v337 = vld [vmem:[%s309 + $0x34] sm:$0xf]
      %v338 = vld [vmem:[%s309 + $0x38] sm:$0xf]
      %v339 = vld [vmem:[%s309 + $0x3c] sm:$0xf]
      %v340 = vld [vmem:[%s1] sm:$0xf]
      %v341 = vld [vmem:[%s1 + $0x4] sm:$0xf]
      %v342 = vld [vmem:[%s1 + $0x8] sm:$0xf]
      %v343 = vld [vmem:[%s1 + $0xc] sm:$0xf]
      %v344 = vld [vmem:[%s2] sm:$0x1]
      %v346 = vlaneseq
      %v347 = vshrl.u32 %v346, 7
      %v348 = vsub.s32 0, %v347
      %v349 = vrot.slane %v344, %v348
      %v367 = vunpack.c.l.b16 %v324
      %v368 = vunpack.c.l.b16 %v325
      %v369 = vunpack.c.l.b16 %v326
      %v370 = vunpack.c.l.b16 %v327
      %v371 = vunpack.c.l.b16 %v328
      %v372 = vunpack.c.l.b16 %v329
      %v373 = vunpack.c.l.b16 %v330
      %v374 = vunpack.c.l.b16 %v331
      %v375 = vunpack.c.l.b16 %v332
      %v376 = vunpack.c.l.b16 %v333
      %v377 = vunpack.c.l.b16 %v334
      %v378 = vunpack.c.l.b16 %v335
      %v379 = vunpack.c.l.b16 %v336
      %v380 = vunpack.c.l.b16 %v337
      %v381 = vunpack.c.l.b16 %v338
      %v382 = vunpack.c.l.b16 %v339
      %v383 = vpack.c.b16 %v368, %v367
      %v384 = vpack.c.b16 %v370, %v369
      %v385 = vpack.c.b16 %v372, %v371
      %v386 = vpack.c.b16 %v374, %v373
      %v387 = vpack.c.b16 %v376, %v375
      %v388 = vpack.c.b16 %v378, %v377
      %v389 = vpack.c.b16 %v380, %v379
      %v390 = vpack.c.b16 %v382, %v381
      %v395 = vunpack.c.l.b16 %v340
      %v396 = vunpack.c.l.b16 %v341
      %v397 = vunpack.c.l.b16 %v342
      %v398 = vunpack.c.l.b16 %v343
      %v399 = vpack.c.b16 %v396, %v395
      %v400 = vpack.c.b16 %v398, %v397
      %vm403 = vcmask 261120
      %v405 = vsel %vm403, %v383, 0
      %v408 = vsel %vm403, %v384, 0
      %v411 = vsel %vm403, %v385, 0
      %v414 = vsel %vm403, %v386, 0
      %v417 = vsel %vm403, %v387, 0
      %v420 = vsel %vm403, %v388, 0
      %v423 = vsel %vm403, %v389, 0
      %v426 = vsel %vm403, %v390, 0
      %428 = vmatprep.subr.bf16.mxu0 0
      %429 = vmatpush1.bf16.msra.mxu0 %v399
      %430 = vmatprep.subr.bf16.mxu0 0
      %431 = vmatpush1.bf16.msra.mxu0 %v400
      %432 = vmatprep.subr.bf16.mxu0 0
      %433 = vmatpush1.bf16.msra.mxu0 0
      %434 = vmatprep.subr.bf16.mxu0 0
      %435 = vmatpush1.bf16.msra.mxu0 0
      %436 = vmatprep.subr.bf16.mxu0 0
      %437 = vmatpush1.bf16.msra.mxu0 0
      %438 = vmatprep.subr.bf16.mxu0 0
      %439 = vmatpush1.bf16.msra.mxu0 0
      %440 = vmatprep.subr.bf16.mxu0 0
      %441 = vmatpush1.bf16.msra.mxu0 0
      %442 = vmatprep.subr.bf16.mxu0 0
      %443 = vmatpush1.bf16.msra.mxu0 0
      %444 = vmatprep.subr.bf16.mxu0 0
      %445 = vmatpush1.bf16.msra.mxu0 0
      %446 = vmatprep.subr.bf16.mxu0 0
      %447 = vmatpush1.bf16.msra.mxu0 0
      %448 = vmatprep.subr.bf16.mxu0 0
      %449 = vmatpush1.bf16.msra.mxu0 0
      %450 = vmatprep.subr.bf16.mxu0 0
      %451 = vmatpush1.bf16.msra.mxu0 0
      %452 = vmatprep.subr.bf16.mxu0 0
      %453 = vmatpush1.bf16.msra.mxu0 0
      %454 = vmatprep.subr.bf16.mxu0 0
      %455 = vmatpush1.bf16.msra.mxu0 0
      %456 = vmatprep.subr.bf16.mxu0 0
      %457 = vmatpush1.bf16.msra.mxu0 0
      %458 = vmatprep.subr.bf16.mxu0 0
      %459 = vmatpush1.bf16.msra.mxu0 0
      %460 = vmatprep.mubr.bf16.mxu0 0
      %461 = vmatmul.mubr.bf16.gmra.mrb[0].mxu0 %v405
      %v462 = vpop.f32.mrb[0].mxu0
      %v463 = vadd.f32 %v349, %v462
      %v464 = vpop.f32.mrb[0].mxu0
      %v465 = vpop.f32.mrb[0].mxu0
      %v466 = vadd.f32 %v349, %v465
      %v467 = vpop.f32.mrb[0].mxu0
      %468 = vmatprep.mubr.bf16.mxu0 0
      %469 = vmatmul.mubr.bf16.gmra.mrb[0].mxu0 %v408
      %v470 = vpop.f32.mrb[0].mxu0
      %v471 = vadd.f32 %v349, %v470
      %v472 = vpop.f32.mrb[0].mxu0
      %v473 = vpop.f32.mrb[0].mxu0
      %v474 = vadd.f32 %v349, %v473
      %v475 = vpop.f32.mrb[0].mxu0
      %476 = vmatprep.mubr.bf16.mxu0 0
      %477 = vmatmul.mubr.bf16.gmra.mrb[0].mxu0 %v411
      %v478 = vpop.f32.mrb[0].mxu0
      %v479 = vadd.f32 %v349, %v478
      %v480 = vpop.f32.mrb[0].mxu0
      %v481 = vpop.f32.mrb[0].mxu0
      %v482 = vadd.f32 %v349, %v481
      %v483 = vpop.f32.mrb[0].mxu0
      %484 = vmatprep.mubr.bf16.mxu0 0
      %485 = vmatmul.mubr.bf16.gmra.mrb[0].mxu0 %v414
      %v486 = vpop.f32.mrb[0].mxu0
      %v487 = vadd.f32 %v349, %v486
      %v488 = vpop.f32.mrb[0].mxu0
      %v489 = vpop.f32.mrb[0].mxu0
      %v490 = vadd.f32 %v349, %v489
      %v491 = vpop.f32.mrb[0].mxu0
      %492 = vmatprep.mubr.bf16.mxu0 0
      %493 = vmatmul.mubr.bf16.gmra.mrb[0].mxu0 %v417
      %v494 = vpop.f32.mrb[0].mxu0
      %v495 = vadd.f32 %v349, %v494
      %v496 = vpop.f32.mrb[0].mxu0
      %v497 = vpop.f32.mrb[0].mxu0
      %v498 = vadd.f32 %v349, %v497
      %v499 = vpop.f32.mrb[0].mxu0
      %500 = vmatprep.mubr.bf16.mxu0 0
      %501 = vmatmul.mubr.bf16.gmra.mrb[0].mxu0 %v420
      %v502 = vpop.f32.mrb[0].mxu0
      %v503 = vadd.f32 %v349, %v502
      %v504 = vpop.f32.mrb[0].mxu0
      %v505 = vpop.f32.mrb[0].mxu0
      %v506 = vadd.f32 %v349, %v505
      %v507 = vpop.f32.mrb[0].mxu0
      %508 = vmatprep.mubr.bf16.mxu0 0
      %509 = vmatmul.mubr.bf16.gmra.mrb[0].mxu0 %v423
      %v510 = vpop.f32.mrb[0].mxu0
      %v511 = vadd.f32 %v349, %v510
      %v512 = vpop.f32.mrb[0].mxu0
      %v513 = vpop.f32.mrb[0].mxu0
      %v514 = vadd.f32 %v349, %v513
      %v515 = vpop.f32.mrb[0].mxu0
      %516 = vmatprep.mubr.bf16.mxu0 0
      %517 = vmatmul.mubr.bf16.gmra.mrb[0].mxu0 %v426
      %v518 = vpop.f32.mrb[0].mxu0
      %v519 = vadd.f32 %v349, %v518
      %v520 = vpop.f32.mrb[0].mxu0
      %v521 = vpop.f32.mrb[0].mxu0
      %v522 = vadd.f32 %v349, %v521
      %v523 = vpop.f32.mrb[0].mxu0
      %524 = vdwg.mxu0
      %v525 = vmax.f32 %v463, 0.0
      %v526 = vmax.f32 %v466, 0.0
      %v527 = vmax.f32 %v471, 0.0
      %v528 = vmax.f32 %v474, 0.0
      %v529 = vmax.f32 %v479, 0.0
      %v530 = vmax.f32 %v482, 0.0
      %v531 = vmax.f32 %v487, 0.0
      %v532 = vmax.f32 %v490, 0.0
      %v533 = vmax.f32 %v495, 0.0
      %v534 = vmax.f32 %v498, 0.0
      %v535 = vmax.f32 %v503, 0.0
      %v536 = vmax.f32 %v506, 0.0
      %v537 = vmax.f32 %v511, 0.0
      %v538 = vmax.f32 %v514, 0.0
      %v539 = vmax.f32 %v519, 0.0
      %v540 = vmax.f32 %v522, 0.0
      %v541 = vand.u32 2147483647, %v463
      %v542 = vand.u32 2147483647, %v466
      %v543 = vand.u32 2147483647, %v471
      %v544 = vand.u32 2147483647, %v474
      %v545 = vand.u32 2147483647, %v479
      %v546 = vand.u32 2147483647, %v482
      %v547 = vand.u32 2147483647, %v487
      %v548 = vand.u32 2147483647, %v490
      %v549 = vand.u32 2147483647, %v495
      %v550 = vand.u32 2147483647, %v498
      %v551 = vand.u32 2147483647, %v503
      %v552 = vand.u32 2147483647, %v506
      %v553 = vand.u32 2147483647, %v511
      %v554 = vand.u32 2147483647, %v514
      %v555 = vand.u32 2147483647, %v519
      %v556 = vand.u32 2147483647, %v522
      %v557 = vsub.f32 0.0, %v541
      %v558 = vsub.f32 0.0, %v542
      %v559 = vsub.f32 0.0, %v543
      %v560 = vsub.f32 0.0, %v544
      %v561 = vsub.f32 0.0, %v545
      %v562 = vsub.f32 0.0, %v546
      %v563 = vsub.f32 0.0, %v547
      %v564 = vsub.f32 0.0, %v548
      %v565 = vsub.f32 0.0, %v549
      %v566 = vsub.f32 0.0, %v550
      %v567 = vsub.f32 0.0, %v551
      %v568 = vsub.f32 0.0, %v552
      %v569 = vsub.f32 0.0, %v553
      %v570 = vsub.f32 0.0, %v554
      %v571 = vsub.f32 0.0, %v555
      %v572 = vsub.f32 0.0, %v556
      %v573 = vmul.f32 %v557, 1.442695
      %v574 = vpow.pop %v573
      %v575 = vmul.f32 %v558, 1.442695
      %v576 = vpow.pop %v575
      %v577 = vmul.f32 %v559, 1.442695
      %v578 = vpow.pop %v577
      %v579 = vmul.f32 %v560, 1.442695
      %v580 = vpow.pop %v579
      %v581 = vmul.f32 %v561, 1.442695
      %v582 = vpow.pop %v581
      %v583 = vmul.f32 %v562, 1.442695
      %v584 = vpow.pop %v583
      %v585 = vmul.f32 %v563, 1.442695
      %v586 = vpow.pop %v585
      %v587 = vmul.f32 %v564, 1.442695
      %v588 = vpow.pop %v587
      %v589 = vmul.f32 %v565, 1.442695
      %v590 = vpow.pop %v589
      %v591 = vmul.f32 %v566, 1.442695
      %v592 = vpow.pop %v591
      %v593 = vmul.f32 %v567, 1.442695
      %v594 = vpow.pop %v593
      %v595 = vmul.f32 %v568, 1.442695
      %v596 = vpow.pop %v595
      %v597 = vmul.f32 %v569, 1.442695
      %v598 = vpow.pop %v597
      %v599 = vmul.f32 %v570, 1.442695
      %v600 = vpow.pop %v599
      %v601 = vmul.f32 %v571, 1.442695
      %v602 = vpow.pop %v601
      %v603 = vmul.f32 %v572, 1.442695
      %v604 = vpow.pop %v603
      %v605 = vadd.f32 %v574, 1.0
      %v606 = vadd.f32 %v576, 1.0
      %v607 = vadd.f32 %v578, 1.0
      %v608 = vadd.f32 %v580, 1.0
      %v609 = vadd.f32 %v582, 1.0
      %v610 = vadd.f32 %v584, 1.0
      %v611 = vadd.f32 %v586, 1.0
      %v612 = vadd.f32 %v588, 1.0
      %v613 = vadd.f32 %v590, 1.0
      %v614 = vadd.f32 %v592, 1.0
      %v615 = vadd.f32 %v594, 1.0
      %v616 = vadd.f32 %v596, 1.0
      %v617 = vadd.f32 %v598, 1.0
      %v618 = vadd.f32 %v600, 1.0
      %v619 = vadd.f32 %v602, 1.0
      %v620 = vadd.f32 %v604, 1.0
      %v621 = vlog2.pop %v605
      %v622 = vmul.f32 %v621, 0.6931472
      %v623 = vlog2.pop %v606
      %v624 = vmul.f32 %v623, 0.6931472
      %v625 = vlog2.pop %v607
      %v626 = vmul.f32 %v625, 0.6931472
      %v627 = vlog2.pop %v608
      %v628 = vmul.f32 %v627, 0.6931472
      %v629 = vlog2.pop %v609
      %v630 = vmul.f32 %v629, 0.6931472
      %v631 = vlog2.pop %v610
      %v632 = vmul.f32 %v631, 0.6931472
      %v633 = vlog2.pop %v611
      %v634 = vmul.f32 %v633, 0.6931472
      %v635 = vlog2.pop %v612
      %v636 = vmul.f32 %v635, 0.6931472
      %v637 = vlog2.pop %v613
      %v638 = vmul.f32 %v637, 0.6931472
      %v639 = vlog2.pop %v614
      %v640 = vmul.f32 %v639, 0.6931472
      %v641 = vlog2.pop %v615
      %v642 = vmul.f32 %v641, 0.6931472
      %v643 = vlog2.pop %v616
      %v644 = vmul.f32 %v643, 0.6931472
      %v645 = vlog2.pop %v617
      %v646 = vmul.f32 %v645, 0.6931472
      %v647 = vlog2.pop %v618
      %v648 = vmul.f32 %v647, 0.6931472
      %v649 = vlog2.pop %v619
      %v650 = vmul.f32 %v649, 0.6931472
      %v651 = vlog2.pop %v620
      %v652 = vmul.f32 %v651, 0.6931472
      %v653 = vadd.f32 %v525, %v622
      %v654 = vadd.f32 %v526, %v624
      %v655 = vadd.f32 %v527, %v626
      %v656 = vadd.f32 %v528, %v628
      %v657 = vadd.f32 %v529, %v630
      %v658 = vadd.f32 %v530, %v632
      %v659 = vadd.f32 %v531, %v634
      %v660 = vadd.f32 %v532, %v636
      %v661 = vadd.f32 %v533, %v638
      %v662 = vadd.f32 %v534, %v640
      %v663 = vadd.f32 %v535, %v642
      %v664 = vadd.f32 %v536, %v644
      %v665 = vadd.f32 %v537, %v646
      %v666 = vadd.f32 %v538, %v648
      %v667 = vadd.f32 %v539, %v650
      %v668 = vadd.f32 %v540, %v652
      %v669 = vpack.c.bf16 %v654, %v653
      %v670 = vpack.c.bf16 %v656, %v655
      %v671 = vpack.c.bf16 %v658, %v657
      %v672 = vpack.c.bf16 %v660, %v659
      %v673 = vpack.c.bf16 %v662, %v661
      %v674 = vpack.c.bf16 %v664, %v663
      %v675 = vpack.c.bf16 %v666, %v665
      %v676 = vpack.c.bf16 %v668, %v667
      %v677 = vld [vmem:[%s3] sm:$0xf]
      %v678 = vld [vmem:[%s3 + $0x4] sm:$0xf]
      %v679 = vld [vmem:[%s3 + $0x8] sm:$0xf]
      %v680 = vld [vmem:[%s3 + $0xc] sm:$0xf]
      %v681 = vld [vmem:[%s3 + $0x10] sm:$0xf]
      %v682 = vld [vmem:[%s3 + $0x14] sm:$0xf]
      %v683 = vld [vmem:[%s3 + $0x18] sm:$0xf]
      %v684 = vld [vmem:[%s3 + $0x1c] sm:$0xf]
      %v685 = vld [vmem:[%s4] sm:$0x1]
      %v687 = vlaneseq
      %v688 = vshrl.u32 %v687, 7
      %v689 = vsub.s32 0, %v688
      %v690 = vrot.slane %v685, %v689
      %v700 = vunpack.c.l.b16 %v677
      %v701 = vunpack.c.l.b16 %v678
      %v702 = vunpack.c.l.b16 %v679
      %v703 = vunpack.c.l.b16 %v680
      %v704 = vunpack.c.l.b16 %v681
      %v705 = vunpack.c.l.b16 %v682
      %v706 = vunpack.c.l.b16 %v683
      %v707 = vunpack.c.l.b16 %v684
      %v708 = vpack.c.b16 %v701, %v700
      %v709 = vpack.c.b16 %v703, %v702
      %v710 = vpack.c.b16 %v705, %v704
      %v711 = vpack.c.b16 %v707, %v706
      %vm716 = vcmask 523264
      %v718 = vsel %vm716, %v669, 0
      %v721 = vsel %vm716, %v670, 0
      %v724 = vsel %vm716, %v671, 0
      %v727 = vsel %vm716, %v672, 0
      %v730 = vsel %vm716, %v673, 0
      %v733 = vsel %vm716, %v674, 0
      %v736 = vsel %vm716, %v675, 0
      %v739 = vsel %vm716, %v676, 0
      %741 = vmatprep.subr.bf16.mxu0 0
      %742 = vmatpush1.bf16.msra.mxu0 %v708
      %743 = vmatprep.subr.bf16.mxu0 0
      %744 = vmatpush1.bf16.msra.mxu0 %v709
      %745 = vmatprep.subr.bf16.mxu0 0
      %746 = vmatpush1.bf16.msra.mxu0 %v710
      %747 = vmatprep.subr.bf16.mxu0 0
      %748 = vmatpush1.bf16.msra.mxu0 %v711
      %749 = vmatprep.subr.bf16.mxu0 0
      %750 = vmatpush1.bf16.msra.mxu0 0
      %751 = vmatprep.subr.bf16.mxu0 0
      %752 = vmatpush1.bf16.msra.mxu0 0
      %753 = vmatprep.subr.bf16.mxu0 0
      %754 = vmatpush1.bf16.msra.mxu0 0
      %755 = vmatprep.subr.bf16.mxu0 0
      %756 = vmatpush1.bf16.msra.mxu0 0
      %757 = vmatprep.subr.bf16.mxu0 0
      %758 = vmatpush1.bf16.msra.mxu0 0
      %759 = vmatprep.subr.bf16.mxu0 0
      %760 = vmatpush1.bf16.msra.mxu0 0
      %761 = vmatprep.subr.bf16.mxu0 0
      %762 = vmatpush1.bf16.msra.mxu0 0
      %763 = vmatprep.subr.bf16.mxu0 0
      %764 = vmatpush1.bf16.msra.mxu0 0
      %765 = vmatprep.subr.bf16.mxu0 0
      %766 = vmatpush1.bf16.msra.mxu0 0
      %767 = vmatprep.subr.bf16.mxu0 0
      %768 = vmatpush1.bf16.msra.mxu0 0
      %769 = vmatprep.subr.bf16.mxu0 0
      %770 = vmatpush1.bf16.msra.mxu0 0
      %771 = vmatprep.subr.bf16.mxu0 0
      %772 = vmatpush1.bf16.msra.mxu0 0
      %773 = vmatprep.mubr.bf16.mxu0 0
      %774 = vmatmul.mubr.bf16.gmra.mrb[0].mxu0 %v718
      %v775 = vpop.f32.mrb[0].mxu0
      %v776 = vadd.f32 %v690, %v775
      %v777 = vpop.f32.mrb[0].mxu0
      %v778 = vpop.f32.mrb[0].mxu0
      %v779 = vadd.f32 %v690, %v778
      %v780 = vpop.f32.mrb[0].mxu0
      %781 = vmatprep.mubr.bf16.mxu0 0
      %782 = vmatmul.mubr.bf16.gmra.mrb[0].mxu0 %v721
      %v783 = vpop.f32.mrb[0].mxu0
      %v784 = vadd.f32 %v690, %v783
      %v785 = vpop.f32.mrb[0].mxu0
      %v786 = vpop.f32.mrb[0].mxu0
      %v787 = vadd.f32 %v690, %v786
      %v788 = vpop.f32.mrb[0].mxu0
      %789 = vmatprep.mubr.bf16.mxu0 0
      %790 = vmatmul.mubr.bf16.gmra.mrb[0].mxu0 %v724
      %v791 = vpop.f32.mrb[0].mxu0
      %v792 = vadd.f32 %v690, %v791
      %v793 = vpop.f32.mrb[0].mxu0
      %v794 = vpop.f32.mrb[0].mxu0
      %v795 = vadd.f32 %v690, %v794
      %v796 = vpop.f32.mrb[0].mxu0
      %797 = vmatprep.mubr.bf16.mxu0 0
      %798 = vmatmul.mubr.bf16.gmra.mrb[0].mxu0 %v727
      %v799 = vpop.f32.mrb[0].mxu0
      %v800 = vadd.f32 %v690, %v799
      %v801 = vpop.f32.mrb[0].mxu0
      %v802 = vpop.f32.mrb[0].mxu0
      %v803 = vadd.f32 %v690, %v802
      %v804 = vpop.f32.mrb[0].mxu0
      %805 = vmatprep.mubr.bf16.mxu0 0
      %806 = vmatmul.mubr.bf16.gmra.mrb[0].mxu0 %v730
      %v807 = vpop.f32.mrb[0].mxu0
      %v808 = vadd.f32 %v690, %v807
      %v809 = vpop.f32.mrb[0].mxu0
      %v810 = vpop.f32.mrb[0].mxu0
      %v811 = vadd.f32 %v690, %v810
      %v812 = vpop.f32.mrb[0].mxu0
      %813 = vmatprep.mubr.bf16.mxu0 0
      %814 = vmatmul.mubr.bf16.gmra.mrb[0].mxu0 %v733
      %v815 = vpop.f32.mrb[0].mxu0
      %v816 = vadd.f32 %v690, %v815
      %v817 = vpop.f32.mrb[0].mxu0
      %v818 = vpop.f32.mrb[0].mxu0
      %v819 = vadd.f32 %v690, %v818
      %v820 = vpop.f32.mrb[0].mxu0
      %821 = vmatprep.mubr.bf16.mxu0 0
      %822 = vmatmul.mubr.bf16.gmra.mrb[0].mxu0 %v736
      %v823 = vpop.f32.mrb[0].mxu0
      %v824 = vadd.f32 %v690, %v823
      %v825 = vpop.f32.mrb[0].mxu0
      %v826 = vpop.f32.mrb[0].mxu0
      %v827 = vadd.f32 %v690, %v826
      %v828 = vpop.f32.mrb[0].mxu0
      %829 = vmatprep.mubr.bf16.mxu0 0
      %830 = vmatmul.mubr.bf16.gmra.mrb[0].mxu0 %v739
      %v831 = vpop.f32.mrb[0].mxu0
      %v832 = vadd.f32 %v690, %v831
      %v833 = vpop.f32.mrb[0].mxu0
      %v834 = vpop.f32.mrb[0].mxu0
      %v835 = vadd.f32 %v690, %v834
      %v836 = vpop.f32.mrb[0].mxu0
      %837 = vdwg.mxu0
      %v838 = vld [vmem:[%s5] sm:$0xf]
      %v839 = vld [vmem:[%s5 + $0x4] sm:$0xf]
      %v840 = vld [vmem:[%s5 + $0x8] sm:$0xf]
      %v841 = vld [vmem:[%s5 + $0xc] sm:$0xf]
      %v842 = vld [vmem:[%s5 + $0x10] sm:$0xf]
      %v843 = vld [vmem:[%s5 + $0x14] sm:$0xf]
      %v844 = vld [vmem:[%s5 + $0x18] sm:$0xf]
      %v845 = vld [vmem:[%s5 + $0x1c] sm:$0xf]
      %v846 = vld [vmem:[%s6] sm:$0x1]
      %v848 = vlaneseq
      %v849 = vshrl.u32 %v848, 7
      %v850 = vsub.s32 0, %v849
      %v851 = vrot.slane %v846, %v850
      %v861 = vunpack.c.l.b16 %v838
      %v862 = vunpack.c.l.b16 %v839
      %v863 = vunpack.c.l.b16 %v840
      %v864 = vunpack.c.l.b16 %v841
      %v865 = vunpack.c.l.b16 %v842
      %v866 = vunpack.c.l.b16 %v843
      %v867 = vunpack.c.l.b16 %v844
      %v868 = vunpack.c.l.b16 %v845
      %v869 = vpack.c.b16 %v862, %v861
      %v870 = vpack.c.b16 %v864, %v863
      %v871 = vpack.c.b16 %v866, %v865
      %v872 = vpack.c.b16 %v868, %v867
      %877 = vmatprep.subr.bf16.mxu0 0
      %878 = vmatpush1.bf16.msra.mxu0 %v869
      %879 = vmatprep.subr.bf16.mxu0 0
      %880 = vmatpush1.bf16.msra.mxu0 %v870
      %881 = vmatprep.subr.bf16.mxu0 0
      %882 = vmatpush1.bf16.msra.mxu0 %v871
      %883 = vmatprep.subr.bf16.mxu0 0
      %884 = vmatpush1.bf16.msra.mxu0 %v872
      %885 = vmatprep.subr.bf16.mxu0 0
      %886 = vmatpush1.bf16.msra.mxu0 0
      %887 = vmatprep.subr.bf16.mxu0 0
      %888 = vmatpush1.bf16.msra.mxu0 0
      %889 = vmatprep.subr.bf16.mxu0 0
      %890 = vmatpush1.bf16.msra.mxu0 0
      %891 = vmatprep.subr.bf16.mxu0 0
      %892 = vmatpush1.bf16.msra.mxu0 0
      %893 = vmatprep.subr.bf16.mxu0 0
      %894 = vmatpush1.bf16.msra.mxu0 0
      %895 = vmatprep.subr.bf16.mxu0 0
      %896 = vmatpush1.bf16.msra.mxu0 0
      %897 = vmatprep.subr.bf16.mxu0 0
      %898 = vmatpush1.bf16.msra.mxu0 0
      %899 = vmatprep.subr.bf16.mxu0 0
      %900 = vmatpush1.bf16.msra.mxu0 0
      %901 = vmatprep.subr.bf16.mxu0 0
      %902 = vmatpush1.bf16.msra.mxu0 0
      %903 = vmatprep.subr.bf16.mxu0 0
      %904 = vmatpush1.bf16.msra.mxu0 0
      %905 = vmatprep.subr.bf16.mxu0 0
      %906 = vmatpush1.bf16.msra.mxu0 0
      %907 = vmatprep.subr.bf16.mxu0 0
      %908 = vmatpush1.bf16.msra.mxu0 0
      %909 = vmatprep.mubr.bf16.mxu0 0
      %910 = vmatmul.mubr.bf16.gmra.mrb[0].mxu0 %v718
      %v911 = vpop.f32.mrb[0].mxu0
      %v912 = vadd.f32 %v851, %v911
      %v913 = vpop.f32.mrb[0].mxu0
      %v914 = vpop.f32.mrb[0].mxu0
      %v915 = vadd.f32 %v851, %v914
      %v916 = vpop.f32.mrb[0].mxu0
      %917 = vmatprep.mubr.bf16.mxu0 0
      %918 = vmatmul.mubr.bf16.gmra.mrb[0].mxu0 %v721
      %v919 = vpop.f32.mrb[0].mxu0
      %v920 = vadd.f32 %v851, %v919
      %v921 = vpop.f32.mrb[0].mxu0
      %v922 = vpop.f32.mrb[0].mxu0
      %v923 = vadd.f32 %v851, %v922
      %v924 = vpop.f32.mrb[0].mxu0
      %925 = vmatprep.mubr.bf16.mxu0 0
      %926 = vmatmul.mubr.bf16.gmra.mrb[0].mxu0 %v724
      %v927 = vpop.f32.mrb[0].mxu0
      %v928 = vadd.f32 %v851, %v927
      %v929 = vpop.f32.mrb[0].mxu0
      %v930 = vpop.f32.mrb[0].mxu0
      %v931 = vadd.f32 %v851, %v930
      %v932 = vpop.f32.mrb[0].mxu0
      %933 = vmatprep.mubr.bf16.mxu0 0
      %934 = vmatmul.mubr.bf16.gmra.mrb[0].mxu0 %v727
      %v935 = vpop.f32.mrb[0].mxu0
      %v936 = vadd.f32 %v851, %v935
      %v937 = vpop.f32.mrb[0].mxu0
      %v938 = vpop.f32.mrb[0].mxu0
      %v939 = vadd.f32 %v851, %v938
      %v940 = vpop.f32.mrb[0].mxu0
      %941 = vmatprep.mubr.bf16.mxu0 0
      %942 = vmatmul.mubr.bf16.gmra.mrb[0].mxu0 %v730
      %v943 = vpop.f32.mrb[0].mxu0
      %v944 = vadd.f32 %v851, %v943
      %v945 = vpop.f32.mrb[0].mxu0
      %v946 = vpop.f32.mrb[0].mxu0
      %v947 = vadd.f32 %v851, %v946
      %v948 = vpop.f32.mrb[0].mxu0
      %949 = vmatprep.mubr.bf16.mxu0 0
      %950 = vmatmul.mubr.bf16.gmra.mrb[0].mxu0 %v733
      %v951 = vpop.f32.mrb[0].mxu0
      %v952 = vadd.f32 %v851, %v951
      %v953 = vpop.f32.mrb[0].mxu0
      %v954 = vpop.f32.mrb[0].mxu0
      %v955 = vadd.f32 %v851, %v954
      %v956 = vpop.f32.mrb[0].mxu0
      %957 = vmatprep.mubr.bf16.mxu0 0
      %958 = vmatmul.mubr.bf16.gmra.mrb[0].mxu0 %v736
      %v959 = vpop.f32.mrb[0].mxu0
      %v960 = vadd.f32 %v851, %v959
      %v961 = vpop.f32.mrb[0].mxu0
      %v962 = vpop.f32.mrb[0].mxu0
      %v963 = vadd.f32 %v851, %v962
      %v964 = vpop.f32.mrb[0].mxu0
      %965 = vmatprep.mubr.bf16.mxu0 0
      %966 = vmatmul.mubr.bf16.gmra.mrb[0].mxu0 %v739
      %v967 = vpop.f32.mrb[0].mxu0
      %v968 = vadd.f32 %v851, %v967
      %v969 = vpop.f32.mrb[0].mxu0
      %v970 = vpop.f32.mrb[0].mxu0
      %v971 = vadd.f32 %v851, %v970
      %v972 = vpop.f32.mrb[0].mxu0
      %973 = vdwg.mxu0
      %vm974 = vcmask 130048
      %975 = vst.msk [vmem:[%s315] sm:$0xff] %vm974, %v776
      %976 = vst.msk [vmem:[%s315 + $0x8] sm:$0xff] %vm974, %v779
      %977 = vst.msk [vmem:[%s315 + $0x10] sm:$0xff] %vm974, %v784
      %978 = vst.msk [vmem:[%s315 + $0x18] sm:$0xff] %vm974, %v787
      %979 = vst.msk [vmem:[%s315 + $0x20] sm:$0xff] %vm974, %v792
      %980 = vst.msk [vmem:[%s315 + $0x28] sm:$0xff] %vm974, %v795
      %981 = vst.msk [vmem:[%s315 + $0x30] sm:$0xff] %vm974, %v800
      %982 = vst.msk [vmem:[%s315 + $0x38] sm:$0xff] %vm974, %v803
      %983 = vst.msk [vmem:[%s315 + $0x40] sm:$0xff] %vm974, %v808
      %984 = vst.msk [vmem:[%s315 + $0x48] sm:$0xff] %vm974, %v811
      %985 = vst.msk [vmem:[%s315 + $0x50] sm:$0xff] %vm974, %v816
      %986 = vst.msk [vmem:[%s315 + $0x58] sm:$0xff] %vm974, %v819
      %987 = vst.msk [vmem:[%s315 + $0x60] sm:$0xff] %vm974, %v824
      %988 = vst.msk [vmem:[%s315 + $0x68] sm:$0xff] %vm974, %v827
      %989 = vst.msk [vmem:[%s315 + $0x70] sm:$0xff] %vm974, %v832
      %990 = vst.msk [vmem:[%s315 + $0x78] sm:$0xff] %vm974, %v835
      %v991 = vmul.f32 %v912, 1.442695
      %v992 = vpow.pop %v991
      %v993 = vmul.f32 %v915, 1.442695
      %v994 = vpow.pop %v993
      %v995 = vmul.f32 %v920, 1.442695
      %v996 = vpow.pop %v995
      %v997 = vmul.f32 %v923, 1.442695
      %v998 = vpow.pop %v997
      %v999 = vmul.f32 %v928, 1.442695
      %v1000 = vpow.pop %v999
      %v1001 = vmul.f32 %v931, 1.442695
      %v1002 = vpow.pop %v1001
      %v1003 = vmul.f32 %v936, 1.442695
      %v1004 = vpow.pop %v1003
      %v1005 = vmul.f32 %v939, 1.442695
      %v1006 = vpow.pop %v1005
      %v1007 = vmul.f32 %v944, 1.442695
      %v1008 = vpow.pop %v1007
      %v1009 = vmul.f32 %v947, 1.442695
      %v1010 = vpow.pop %v1009
      %v1011 = vmul.f32 %v952, 1.442695
      %v1012 = vpow.pop %v1011
      %v1013 = vmul.f32 %v955, 1.442695
      %v1014 = vpow.pop %v1013
      %v1015 = vmul.f32 %v960, 1.442695
      %v1016 = vpow.pop %v1015
      %v1017 = vmul.f32 %v963, 1.442695
      %v1018 = vpow.pop %v1017
      %v1019 = vmul.f32 %v968, 1.442695
      %v1020 = vpow.pop %v1019
      %v1021 = vmul.f32 %v971, 1.442695
      %v1022 = vpow.pop %v1021
      %1023 = vst.msk [vmem:[%s321] sm:$0xff] %vm974, %v992
      %1024 = vst.msk [vmem:[%s321 + $0x8] sm:$0xff] %vm974, %v994
      %1025 = vst.msk [vmem:[%s321 + $0x10] sm:$0xff] %vm974, %v996
      %1026 = vst.msk [vmem:[%s321 + $0x18] sm:$0xff] %vm974, %v998
      %1027 = vst.msk [vmem:[%s321 + $0x20] sm:$0xff] %vm974, %v1000
      %1028 = vst.msk [vmem:[%s321 + $0x28] sm:$0xff] %vm974, %v1002
      %1029 = vst.msk [vmem:[%s321 + $0x30] sm:$0xff] %vm974, %v1004
      %1030 = vst.msk [vmem:[%s321 + $0x38] sm:$0xff] %vm974, %v1006
      %1031 = vst.msk [vmem:[%s321 + $0x40] sm:$0xff] %vm974, %v1008
      %1032 = vst.msk [vmem:[%s321 + $0x48] sm:$0xff] %vm974, %v1010
      %1033 = vst.msk [vmem:[%s321 + $0x50] sm:$0xff] %vm974, %v1012
      %1034 = vst.msk [vmem:[%s321 + $0x58] sm:$0xff] %vm974, %v1014
      %1035 = vst.msk [vmem:[%s321 + $0x60] sm:$0xff] %vm974, %v1016
      %1036 = vst.msk [vmem:[%s321 + $0x68] sm:$0xff] %vm974, %v1018
      %1037 = vst.msk [vmem:[%s321 + $0x70] sm:$0xff] %vm974, %v1020
      %1038 = vst.msk [vmem:[%s321 + $0x78] sm:$0xff] %vm974, %v1022
      %s1039 = smul.u32 16, %s20
      %p1040 = scmp.lt.s32.totalorder %s1039, 31
      %s1041 = scalar_select %p1040, %s1039, 31
      %s1042 = smul.addr %s1041, 8
      %s1043 = scalar_lea.vmem %s7, %s1042
      %s1044 = smul.u32 16, %s20
      %p1045 = scmp.lt.s32.totalorder %s1044, 31
      %s1046 = scalar_select %p1045, %s1044, 31
      %s1047 = smul.addr %s1046, 8
      %s1048 = scalar_lea.vmem %s8, %s1047
      // Predicated region
      $region49: #{tpu_custom_call.1} parent=47 // pred_check
        %p1049 = pneg %p190
      $region50: #{tpu_custom_call.1} parent=47 // pred_check_branch
        %1051 = sbr.rel (%p1049) target = $region52
      $region51: #{tpu_custom_call.1} parent=47 // pred_region
        %s1052 = smul.u32 16, %s20
      $region52: #{tpu_custom_call.1} parent=47 // pred_fallthru
        _
      // Predicated region
      $region53: #{tpu_custom_call.1} parent=47 // pred_check
        %p1053 = pneg %p216
      $region54: #{tpu_custom_call.1} parent=47 // pred_check_branch
        %1055 = sbr.rel (%p1053) target = $region56
      $region55: #{tpu_custom_call.1} parent=47 // pred_region
        %s1056 = smul.u32 16, %s20
      $region56: #{tpu_custom_call.1} parent=47 // pred_fallthru
        _
    $region48: #{tpu_custom_call.1} parent=5 // pred_fallthru
      _
    %p1057 = scmp.le.s32.totalorder 2, %s15
    // Predicated region
    $region57: #{tpu_custom_call.1} parent=5 // pred_check
      %p1058 = pneg %p1057
    $region58: #{tpu_custom_call.1} parent=5 // pred_check_branch
      %1060 = sbr.rel (%p1058) target = $region60
    $region59: #{tpu_custom_call.1} parent=5 // pred_region
      %s1061 = ssub.s32 %s15, 2
      // Predicated region
      $region61: #{tpu_custom_call.1} parent=59 // pred_check
        %p1062 = pneg %p196
      $region62: #{tpu_custom_call.1} parent=59 // pred_check_branch
        %1064 = sbr.rel (%p1062) target = $region64
      $region63: #{tpu_custom_call.1} parent=59 // pred_region
        %s1065 = smul.u32 16, %s21
        %p1066 = scmp.lt.s32.totalorder %s1065, 31
        %s1067 = scalar_select %p1066, %s1065, 31
        %s1068 = smul.addr %s1067, 8
        %s1069 = scalar_lea.vmem %s7, %s1068
      $region64: #{tpu_custom_call.1} parent=59 // pred_fallthru
        _
      // Predicated region
      $region65: #{tpu_custom_call.1} parent=59 // pred_check
        %p1070 = pneg %p222
      $region66: #{tpu_custom_call.1} parent=59 // pred_check_branch
        %1072 = sbr.rel (%p1070) target = $region68
      $region67: #{tpu_custom_call.1} parent=59 // pred_region
        %s1073 = smul.u32 16, %s21
        %p1074 = scmp.lt.s32.totalorder %s1073, 31
        %s1075 = scalar_select %p1074, %s1073, 31
        %s1076 = smul.addr %s1075, 8
        %s1077 = scalar_lea.vmem %s8, %s1076
      $region68: #{tpu_custom_call.1} parent=59 // pred_fallthru
        _
    $region60: #{tpu_custom_call.1} parent=5 // pred_fallthru
      _
  $region6: #{tpu_custom_call.1} parent=0 // loop_footer
    %s19 = sadd.s32 1, %s15
  $region7: #{tpu_custom_call.1} parent=0 // loop_footer_branch
    %14 = sbr.rel target = $region3
  $region8: #{tpu_custom_call.1} parent=0 // loop_exit
    _

</llo_original>
